<compile_context>
chip_gen: v5e
topology: v5e:2x2
jax: 0.10.0
libtpu: 0.0.40
codegen_flags: <defaults>
</compile_context>

<pallas_src>
import functools

import jax
import jax.numpy as jnp
from jax.experimental import pallas as pl
from jax.experimental.pallas import tpu as pltpu


def _make_divisible(ch, divisor=8, min_ch=None):
    if min_ch is None:
        min_ch = divisor
    new_ch = max(min_ch, int(ch + divisor / 2) // divisor * divisor)
    if new_ch < 0.9 * ch:
        new_ch += divisor
    return new_ch


def se_kernel(x_ref, w1t_ref, b1_ref, w2t_ref, b2_ref, o_ref, *, inv_hw):
    # x_ref: (Nb, C, HW)   w1t: (C, S)  b1: (1, S)  w2t: (S, C)  b2: (1, C)
    x = x_ref[...]                                              # (Nb, C, HW)

    # adaptive_avg_pool2d == spatial mean; accumulate in f32 without
    # materializing a full f32 copy of the block.
    pooled = jnp.sum(x, axis=-1, dtype=jnp.float32) * inv_hw    # (Nb, C) f32

    # fc1 (1x1 conv) + ReLU, row-vector orientation.
    h = jnp.dot(pooled, w1t_ref[...],
                preferred_element_type=jnp.float32) + b1_ref[...]   # (Nb, S)
    h = jnp.maximum(h, 0.0)

    # fc2 (1x1 conv) + hardsigmoid: relu6(x + 3) / 6.  Gate stays f32.
    s = jnp.dot(h, w2t_ref[...],
                preferred_element_type=jnp.float32) + b2_ref[...]   # (Nb, C)
    s = jnp.clip(s + 3.0, 0.0, 6.0) * (1.0 / 6.0)

    # Multiply in f32 (x promotes), round ONCE to the output dtype.
    o_ref[...] = (s[:, :, None] * x).astype(o_ref.dtype)


def _tpu_vmem_params():
    """Return (budget_bytes, limit_bytes, prefer_two_steps) for this TPU.

    v5e/v6e: 128 MiB VMEM, 1 TensorCore -> large blocks, no step-count pref.
    v7x (or unknown): 64 MiB per TC, 2 TCs -> conservative, prefer >= 2 steps.
    """
    try:
        vmem = pltpu.get_tpu_info().vmem_capacity_bytes
    except Exception:  # info unavailable -> conservative defaults
        vmem = None
    if vmem is not None and vmem > (96 << 20):
        return (88 << 20, 100 << 20, False)     # v5e / v6e (128 MiB physical)
    return (40 << 20, 56 << 20, True)           # v7x-safe (64 MiB physical)


def _choose_batch_block(n, per_image_bytes, budget_bytes, prefer_two_steps):
    """Largest divisor of n whose double-buffered (in + out) block fits the
    VMEM budget.  On v7x we prefer choices leaving >= 2 grid steps so both
    TensorCores (sharded over the parallel grid axis) get work."""
    max_nb = max(1, budget_bytes // (4 * per_image_bytes))
    divisors = [d for d in range(1, n + 1) if n % d == 0 and d <= max_nb]
    if prefer_two_steps:
        two_steps = [d for d in divisors if n // d >= 2]
        if two_steps:
            return max(two_steps)
    return max(divisors)


def squeeze_excitation(x_nchw, w1, b1, w2, b2, *, io_dtype=None,
                       vmem_budget_bytes=None, vmem_limit_bytes=None):
    """SE block: x * hardsigmoid(fc2(relu(fc1(avgpool(x))))).

    x_nchw : (N, C, H, W)
    w1     : (S, C)  fc1 1x1-conv weight (out, in)     b1 : (S,)
    w2     : (C, S)  fc2 1x1-conv weight (out, in)     b2 : (C,)
    io_dtype: optional dtype for HBM<->VMEM x traffic (e.g. bfloat16, ~2x
              less HBM bytes on this bandwidth-bound op); internal pooling /
              fc / gate math is always f32.  Default None keeps the input
              dtype so forward semantics match the PyTorch module exactly.
    """
    N, C, H, W = x_nchw.shape
    S = w1.shape[0]
    HW = H * W

    if io_dtype is not None:
        x_nchw = x_nchw.astype(io_dtype)
    x = x_nchw.reshape(N, C, HW)          # metadata-only; no pad, no extra pass

    # Row-vector orientation for the fc layers, row-shaped biases (f32).
    w1t = jnp.asarray(w1, jnp.float32).T.reshape(C, S)       # (C, S)
    w2t = jnp.asarray(w2, jnp.float32).T.reshape(S, C)       # (S, C)
    b1r = jnp.asarray(b1, jnp.float32).reshape(1, S)
    b2r = jnp.asarray(b2, jnp.float32).reshape(1, C)

    budget, limit, prefer_two = _tpu_vmem_params()
    if vmem_budget_bytes is not None:
        budget = vmem_budget_bytes
    if vmem_limit_bytes is not None:
        limit = vmem_limit_bytes

    # Constant weight/bias operands are tiny but still double-buffered by the
    # pipeline; subtract their footprint from the x budget instead of relying
    # on pipeline_mode tweaks.
    weight_bytes = 2 * int(w1t.size + b1r.size + w2t.size + b2r.size) * 4
    per_image_bytes = C * HW * x.dtype.itemsize
    usable = max(budget - weight_bytes, 4 * per_image_bytes)
    nb = _choose_batch_block(N, per_image_bytes, usable, prefer_two)
    grid = (N // nb,)
    # TODO(synk): when grid == (1,) (e.g. N == 1 huge image) one v7x
    # TensorCore idles; a second parallel grid axis over spatial tiles with a
    # partial-sum accumulator + pl.when finalize would recover it at the cost
    # of a second read pass of x for the scale multiply.

    # Advisory cost hint: large memory-bound custom call.
    itemsize = x.dtype.itemsize
    cost = pl.CostEstimate(
        flops=int(4 * N * C * S + 2 * N * C * HW),
        transcendentals=0,
        bytes_accessed=int(2 * N * C * HW * itemsize + weight_bytes),
    )

    kernel = functools.partial(se_kernel, inv_hw=float(1.0 / HW))

    out = pl.pallas_call(
        kernel,
        out_shape=jax.ShapeDtypeStruct((N, C, HW), x.dtype),
        grid_spec=pltpu.PrefetchScalarGridSpec(
            num_scalar_prefetch=0,
            grid=grid,
            in_specs=[
                # Full-extent C / HW last dims: exempt from (8,128) rule, no pad.
                pl.BlockSpec((nb, C, HW), lambda i: (i, 0, 0)),
                pl.BlockSpec((C, S), lambda i: (0, 0)),
                pl.BlockSpec((1, S), lambda i: (0, 0)),
                pl.BlockSpec((S, C), lambda i: (0, 0)),
                pl.BlockSpec((1, C), lambda i: (0, 0)),
            ],
            out_specs=pl.BlockSpec((nb, C, HW), lambda i: (i, 0, 0)),
        ),
        compiler_params=pltpu.CompilerParams(
            dimension_semantics=("parallel",),
            vmem_limit_bytes=int(limit),
        ),
        cost_estimate=cost,
    )(x, w1t, b1r, w2t, b2r)

    return out.reshape(N, C, H, W)        # metadata-only reshape


if __name__ == "__main__":
    # Small shapes consistent with the module; H=W=14 -> HW=196 exercises the
    # non-multiple-of-128 (unpadded, full-extent) lane path.
    N, C, H, W = 2, 16, 14, 14
    squeeze_factor = 4
    S = _make_divisible(C // squeeze_factor, 8)   # -> 8

    key = jax.random.PRNGKey(0)
    kx, k1, k2, k3, k4 = jax.random.split(key, 5)

    x = jax.random.normal(kx, (N, C, H, W), dtype=jnp.float32)
    # 1x1 conv weights == dense matrices (out, in); biases (out,).
    w1 = jax.random.normal(k1, (S, C), dtype=jnp.float32) * 0.1
    b1 = jax.random.normal(k2, (S,), dtype=jnp.float32) * 0.1
    w2 = jax.random.normal(k3, (C, S), dtype=jnp.float32) * 0.1
    b2 = jax.random.normal(k4, (C,), dtype=jnp.float32) * 0.1

    out = squeeze_excitation(x, w1, b1, w2, b2)
    jax.block_until_ready(out)

    # Pure-JAX reference (same math as PyTorch SqueezeExcitation).
    pooled = jnp.mean(x, axis=(2, 3))                         # (N, C)
    h = jnp.maximum(pooled @ w1.T + b1, 0.0)                  # (N, S)
    s = h @ w2.T + b2                                         # (N, C)
    s = jnp.clip(s + 3.0, 0.0, 6.0) / 6.0
    ref = s[:, :, None, None] * x

    assert jnp.allclose(out, ref, atol=1e-5, rtol=1e-5), "f32 mismatch vs reference"

    # bf16 I/O path (halves HBM traffic; internal accumulation stays f32).
    out_bf16 = squeeze_excitation(x, w1, b1, w2, b2, io_dtype=jnp.bfloat16)
    jax.block_until_ready(out_bf16)
    assert jnp.allclose(out_bf16.astype(jnp.float32), ref, atol=1e-1, rtol=1e-1), \
        "bf16 mismatch vs reference"

    print("KERNEL_OK")
</pallas_src>

<mosaic_0001>
module attributes {stable_mosaic.version = 11 : i64} {
  func.func @se_kernel(%arg0: i32, %arg1: memref<1x16x196xf32, #tpu.memory_space<vmem>>, %arg2: memref<16x8xf32, #tpu.memory_space<vmem>>, %arg3: memref<1x8xf32, #tpu.memory_space<vmem>>, %arg4: memref<8x16xf32, #tpu.memory_space<vmem>>, %arg5: memref<1x16xf32, #tpu.memory_space<vmem>>, %arg6: memref<1x16x196xf32, #tpu.memory_space<vmem>>) attributes {dimension_semantics = [#tpu.dimension_semantics<parallel>], iteration_bounds = array<i64: 2>, scalar_prefetch = 0 : i64, scratch_operands = 0 : i64, tpu.core_type = #tpu.core_type<tc>, window_params = [{transform_indices = @transform_0, window_bounds = array<i64: 1, 16, 196>}, {pipeline_mode = #tpu.pipeline_mode<synchronous>, transform_indices = @transform_1, window_bounds = array<i64: 16, 8>}, {pipeline_mode = #tpu.pipeline_mode<synchronous>, transform_indices = @transform_2, window_bounds = array<i64: 1, 8>}, {pipeline_mode = #tpu.pipeline_mode<synchronous>, transform_indices = @transform_3, window_bounds = array<i64: 8, 16>}, {pipeline_mode = #tpu.pipeline_mode<synchronous>, transform_indices = @transform_4, window_bounds = array<i64: 1, 16>}, {transform_indices = @transform_5, window_bounds = array<i64: 1, 16, 196>}]} {
    %c0 = arith.constant 0 : index
    %c0_0 = arith.constant 0 : index
    %c0_1 = arith.constant 0 : index
    %0 = vector.load %arg1[%c0, %c0_0, %c0_1] : memref<1x16x196xf32, #tpu.memory_space<vmem>>, vector<1x16x196xf32>
    %cst = arith.constant dense<0.000000e+00> : vector<1x16xf32>
    %1 = vector.multi_reduction <add>, %0, %cst [2] : vector<1x16x196xf32> to vector<1x16xf32>
    %cst_2 = arith.constant 0.00510204071 : f32
    %2 = vector.broadcast %cst_2 : f32 to vector<1x16xf32>
    %3 = arith.mulf %1, %2 : vector<1x16xf32>
    %c0_3 = arith.constant 0 : index
    %c0_4 = arith.constant 0 : index
    %4 = vector.load %arg2[%c0_3, %c0_4] : memref<16x8xf32, #tpu.memory_space<vmem>>, vector<16x8xf32>
    %cst_5 = arith.constant dense<0.000000e+00> : vector<1x8xf32>
    %5 = tpu.matmul %3, %4, %cst_5 {dimension_numbers = #tpu.dot_dimension_numbers<[1], [0], [0], [1], [0, 0, 1, 1], [], []>} : vector<1x16xf32>, vector<16x8xf32>, vector<1x8xf32> -> vector<1x8xf32>
    %c0_6 = arith.constant 0 : index
    %c0_7 = arith.constant 0 : index
    %6 = vector.load %arg3[%c0_6, %c0_7] : memref<1x8xf32, #tpu.memory_space<vmem>>, vector<1x8xf32>
    %7 = arith.addf %5, %6 : vector<1x8xf32>
    %cst_8 = arith.constant 0.000000e+00 : f32
    %8 = vector.broadcast %cst_8 : f32 to vector<1x8xf32>
    %9 = arith.maximumf %7, %8 : vector<1x8xf32>
    %c0_9 = arith.constant 0 : index
    %c0_10 = arith.constant 0 : index
    %10 = vector.load %arg4[%c0_9, %c0_10] : memref<8x16xf32, #tpu.memory_space<vmem>>, vector<8x16xf32>
    %cst_11 = arith.constant dense<0.000000e+00> : vector<1x16xf32>
    %11 = tpu.matmul %9, %10, %cst_11 {dimension_numbers = #tpu.dot_dimension_numbers<[1], [0], [0], [1], [0, 0, 1, 1], [], []>} : vector<1x8xf32>, vector<8x16xf32>, vector<1x16xf32> -> vector<1x16xf32>
    %c0_12 = arith.constant 0 : index
    %c0_13 = arith.constant 0 : index
    %12 = vector.load %arg5[%c0_12, %c0_13] : memref<1x16xf32, #tpu.memory_space<vmem>>, vector<1x16xf32>
    %13 = arith.addf %11, %12 : vector<1x16xf32>
    %cst_14 = arith.constant 3.000000e+00 : f32
    %14 = vector.broadcast %cst_14 : f32 to vector<1x16xf32>
    %15 = arith.addf %13, %14 : vector<1x16xf32>
    %cst_15 = arith.constant 0.000000e+00 : f32
    %cst_16 = arith.constant 6.000000e+00 : f32
    %16 = vector.broadcast %cst_15 : f32 to vector<1x16xf32>
    %17 = arith.maximumf %16, %15 : vector<1x16xf32>
    %18 = vector.broadcast %cst_16 : f32 to vector<1x16xf32>
    %19 = arith.minimumf %18, %17 : vector<1x16xf32>
    %cst_17 = arith.constant 0.166666672 : f32
    %20 = vector.broadcast %cst_17 : f32 to vector<1x16xf32>
    %21 = arith.mulf %19, %20 : vector<1x16xf32>
    %22 = vector.shape_cast %21 : vector<1x16xf32> to vector<1x16x1xf32>
    %23 = vector.broadcast %22 : vector<1x16x1xf32> to vector<1x16x196xf32>
    %24 = arith.mulf %23, %0 : vector<1x16x196xf32>
    %c0_18 = arith.constant 0 : index
    %c0_19 = arith.constant 0 : index
    %c0_20 = arith.constant 0 : index
    %25 = vector.load %arg6[%c0_18, %c0_19, %c0_20] : memref<1x16x196xf32, #tpu.memory_space<vmem>>, vector<1x16x196xf32>
    tpu.vector_store %arg6[%c0_18, %c0_19, %c0_20], %24 {strides = array<i32>} : memref<1x16x196xf32, #tpu.memory_space<vmem>>, vector<1x16x196xf32>,
    return
  }
  func.func @transform_0(%arg0: i32) -> (i32, i32, i32) {
    %c0_i32 = arith.constant 0 : i32
    %c0_i32_0 = arith.constant 0 : i32
    %c0_i32_1 = arith.constant 0 : i32
    return %arg0, %c0_i32, %c0_i32_0 : i32, i32, i32
  }
  func.func @transform_1(%arg0: i32) -> (i32, i32) {
    %c0_i32 = arith.constant 0 : i32
    %c0_i32_0 = arith.constant 0 : i32
    %c0_i32_1 = arith.constant 0 : i32
    return %c0_i32, %c0_i32_0 : i32, i32
  }
  func.func @transform_2(%arg0: i32) -> (i32, i32) {
    %c0_i32 = arith.constant 0 : i32
    %c0_i32_0 = arith.constant 0 : i32
    %c0_i32_1 = arith.constant 0 : i32
    return %c0_i32, %c0_i32_0 : i32, i32
  }
  func.func @transform_3(%arg0: i32) -> (i32, i32) {
    %c0_i32 = arith.constant 0 : i32
    %c0_i32_0 = arith.constant 0 : i32
    %c0_i32_1 = arith.constant 0 : i32
    return %c0_i32, %c0_i32_0 : i32, i32
  }
  func.func @transform_4(%arg0: i32) -> (i32, i32) {
    %c0_i32 = arith.constant 0 : i32
    %c0_i32_0 = arith.constant 0 : i32
    %c0_i32_1 = arith.constant 0 : i32
    return %c0_i32, %c0_i32_0 : i32, i32
  }
  func.func @transform_5(%arg0: i32) -> (i32, i32, i32) {
    %c0_i32 = arith.constant 0 : i32
    %c0_i32_0 = arith.constant 0 : i32
    %c0_i32_1 = arith.constant 0 : i32
    return %arg0, %c0_i32, %c0_i32_0 : i32, i32, i32
  }
}

</mosaic_0001>

<llo_original>
// kernel: tpu_custom_call.1
$region0: #{tpu_custom_call.1}
  #allocation0 [shape = 'u32[]', space=smem, size = 0x4, offset = 0x4, fixed_abs, tag = 'smem constant byte address 0x4 - core index']
  #allocation1 [shape = 'u32[72,128]{1,0:T(1,128)}', space=vmem, size = 0x9000, scoped, tag = 'internal scratch']
  %s0 = inlined_call_operand.hbm [shape: f32[2,16,196], index: 0, kind: input, shape index: {}]
  %s1 = inlined_call_operand.vmem [shape: f32[16,8], index: 1, kind: input, shape index: {}]
  %s2 = inlined_call_operand.vmem [shape: f32[1,8], index: 2, kind: input, shape index: {}]
  %s3 = inlined_call_operand.vmem [shape: f32[8,16], index: 3, kind: input, shape index: {}]
  %s4 = inlined_call_operand.vmem [shape: f32[1,16], index: 4, kind: input, shape index: {}]
  %s5 = inlined_call_operand.hbm [shape: f32[2,16,196], index: 5, kind: output, shape index: {}]
  %s6 = sld [smem:[#allocation0]]
  $region57: #{tpu_custom_call.1} parent=0
    _
  %s8 = ssub.s32 1, %s6
  %s9 = scalar_select 0, %s8, %s6
  $region1: #{tpu_custom_call.1} parent=0
    #allocation2 [shape = 'u8[32768]{0}', space=vmem, size = 0x8000, scoped, tag = 'input window, operand 0']
    #allocation3 [shape = 's32[2]{0}', space=sflag, size = 0x8, scoped, tag = 'scoped memory for tpu_custom_call.1']
    #allocation4 [shape = 's32[2]{0}', space=sflag, size = 0x8, scoped, tag = 'scoped memory for tpu_custom_call.1']
    #allocation5 [shape = 'u8[32768]{0}', space=vmem, size = 0x8000, scoped, tag = 'output window, operand 0']
    %10 = vsyncpa [#allocation3], 0
    %s11 = scalar_lea.sflag [#allocation3], 1
    %12 = vsyncpa %s11, 0
    %13 = vsyncpa [#allocation4], 0
    %s14 = scalar_lea.sflag [#allocation4], 1
    %15 = vsyncpa %s14, 0
    loop: start=0, step=1, limit=4
    $region2: #{tpu_custom_call.1} parent=1 // loop_pre_header
      _
    $region3: #{tpu_custom_call.1} parent=1 // loop_header
      %s17 = sphi 0, %s21
      %p18 = scmp.ge.s32.totalorder %s17, 4
      %s27 = sphi 0, %s29
      %s30 = sphi 0, %s27
      %s31 = sphi 0, %s30
      %s47 = sphi 0, %s31
      %s51 = sphi 0, %s51
      %s53 = sphi 0, %s51
      %s54 = sphi 0, %s53
      %s68 = sphi 0, %s54
      %s72 = sphi 0, %s72
      %s74 = sphi 0, %s72
      %s75 = sphi 0, %s74
      %s89 = sphi 0, %s75
      %s93 = sphi 0, %s93
      %s95 = sphi 0, %s93
      %s96 = sphi 0, %s95
      %s110 = sphi 0, %s96
      %s114 = sphi 0, %s114
      %s116 = sphi 0, %s114
      %s117 = sphi 0, %s116
      %s131 = sphi 0, %s117
      %s137 = sphi 0, %s139
      %s140 = sphi 0, %s137
      %s141 = sphi 0, %s140
      %s157 = sphi 0, %s141
    $region4: #{tpu_custom_call.1} parent=1 // loop_header_branch
      %20 = sbr.rel (%p18) target = $region8
    $region5: #{tpu_custom_call.1} parent=1 // loop_body
      %s22 = ssub.s32 %s17, 1
      %s23 = ssub.s32 %s17, 2
      %s24 = sadd.s32 %s17, 1
      %s25 = ssub.s32 %s17, %s24
      %p26 = scmp.eq.s32.totalorder %s25, 0
      %s28 = sadd.s32 %s27, 1
      %s29 = scalar_select %p26, %s27, %s28
      %p32 = pneg %p26
      %p33 = scmp.eq.s32.totalorder %s17, 1
      %p34 = por %p32, %p33
      %p35 = scmp.ne.s32.totalorder %s27, %s30
      %p36 = scmp.eq.s32.totalorder %s17, 0
      %p37 = por %p35, %p36
      %p38 = scmp.ne.s32.totalorder %s27, %s30
      %p39 = scmp.eq.s32.totalorder %s22, 1
      %p40 = por %p38, %p39
      %p41 = scmp.ne.s32.totalorder %s30, %s31
      %p42 = scmp.eq.s32.totalorder %s22, 0
      %p43 = por %p41, %p42
      %p44 = scmp.ne.s32.totalorder %s30, %s31
      %p45 = scmp.eq.s32.totalorder %s23, 1
      %p46 = por %p44, %p45
      %p48 = scmp.ne.s32.totalorder %s31, %s47
      %p49 = scmp.eq.s32.totalorder %s23, 0
      %p50 = por %p48, %p49
      %s52 = sadd.s32 %s51, 1
      %p55 = scmp.eq.s32.totalorder %s17, 1
      %p56 = scmp.ne.s32.totalorder %s51, %s53
      %p57 = scmp.eq.s32.totalorder %s17, 0
      %p58 = por %p56, %p57
      %p59 = scmp.ne.s32.totalorder %s51, %s53
      %p60 = scmp.eq.s32.totalorder %s22, 1
      %p61 = por %p59, %p60
      %p62 = scmp.ne.s32.totalorder %s53, %s54
      %p63 = scmp.eq.s32.totalorder %s22, 0
      %p64 = por %p62, %p63
      %p65 = scmp.ne.s32.totalorder %s53, %s54
      %p66 = scmp.eq.s32.totalorder %s23, 1
      %p67 = por %p65, %p66
      %p69 = scmp.ne.s32.totalorder %s54, %s68
      %p70 = scmp.eq.s32.totalorder %s23, 0
      %p71 = por %p69, %p70
      %s73 = sadd.s32 %s72, 1
      %p76 = scmp.eq.s32.totalorder %s17, 1
      %p77 = scmp.ne.s32.totalorder %s72, %s74
      %p78 = scmp.eq.s32.totalorder %s17, 0
      %p79 = por %p77, %p78
      %p80 = scmp.ne.s32.totalorder %s72, %s74
      %p81 = scmp.eq.s32.totalorder %s22, 1
      %p82 = por %p80, %p81
      %p83 = scmp.ne.s32.totalorder %s74, %s75
      %p84 = scmp.eq.s32.totalorder %s22, 0
      %p85 = por %p83, %p84
      %p86 = scmp.ne.s32.totalorder %s74, %s75
      %p87 = scmp.eq.s32.totalorder %s23, 1
      %p88 = por %p86, %p87
      %p90 = scmp.ne.s32.totalorder %s75, %s89
      %p91 = scmp.eq.s32.totalorder %s23, 0
      %p92 = por %p90, %p91
      %s94 = sadd.s32 %s93, 1
      %p97 = scmp.eq.s32.totalorder %s17, 1
      %p98 = scmp.ne.s32.totalorder %s93, %s95
      %p99 = scmp.eq.s32.totalorder %s17, 0
      %p100 = por %p98, %p99
      %p101 = scmp.ne.s32.totalorder %s93, %s95
      %p102 = scmp.eq.s32.totalorder %s22, 1
      %p103 = por %p101, %p102
      %p104 = scmp.ne.s32.totalorder %s95, %s96
      %p105 = scmp.eq.s32.totalorder %s22, 0
      %p106 = por %p104, %p105
      %p107 = scmp.ne.s32.totalorder %s95, %s96
      %p108 = scmp.eq.s32.totalorder %s23, 1
      %p109 = por %p107, %p108
      %p111 = scmp.ne.s32.totalorder %s96, %s110
      %p112 = scmp.eq.s32.totalorder %s23, 0
      %p113 = por %p111, %p112
      %s115 = sadd.s32 %s114, 1
      %p118 = scmp.eq.s32.totalorder %s17, 1
      %p119 = scmp.ne.s32.totalorder %s114, %s116
      %p120 = scmp.eq.s32.totalorder %s17, 0
      %p121 = por %p119, %p120
      %p122 = scmp.ne.s32.totalorder %s114, %s116
      %p123 = scmp.eq.s32.totalorder %s22, 1
      %p124 = por %p122, %p123
      %p125 = scmp.ne.s32.totalorder %s116, %s117
      %p126 = scmp.eq.s32.totalorder %s22, 0
      %p127 = por %p125, %p126
      %p128 = scmp.ne.s32.totalorder %s116, %s117
      %p129 = scmp.eq.s32.totalorder %s23, 1
      %p130 = por %p128, %p129
      %p132 = scmp.ne.s32.totalorder %s117, %s131
      %p133 = scmp.eq.s32.totalorder %s23, 0
      %p134 = por %p132, %p133
      %s135 = ssub.s32 %s17, %s24
      %p136 = scmp.eq.s32.totalorder %s135, 0
      %s138 = sadd.s32 %s137, 1
      %s139 = scalar_select %p136, %s137, %s138
      %p142 = pneg %p136
      %p143 = scmp.eq.s32.totalorder %s17, 1
      %p144 = por %p142, %p143
      %p145 = scmp.ne.s32.totalorder %s137, %s140
      %p146 = scmp.eq.s32.totalorder %s17, 0
      %p147 = por %p145, %p146
      %p148 = scmp.ne.s32.totalorder %s137, %s140
      %p149 = scmp.eq.s32.totalorder %s22, 1
      %p150 = por %p148, %p149
      %p151 = scmp.ne.s32.totalorder %s140, %s141
      %p152 = scmp.eq.s32.totalorder %s22, 0
      %p153 = por %p151, %p152
      %p154 = scmp.ne.s32.totalorder %s140, %s141
      %p155 = scmp.eq.s32.totalorder %s23, 1
      %p156 = por %p154, %p155
      %p158 = scmp.ne.s32.totalorder %s141, %s157
      %p159 = scmp.eq.s32.totalorder %s23, 0
      %p160 = por %p158, %p159
      %p161 = scmp.le.s32.totalorder 1, %s17
      %p162 = scmp.lt.s32.totalorder %s17, 3
      %p163 = pnand %p161, %p162
      %p164 = pneg %p163
      // Predicated region
      $region9: #{tpu_custom_call.1} parent=5 // pred_check
        _
      $region10: #{tpu_custom_call.1} parent=5 // pred_check_branch
        %166 = sbr.rel (%p163) target = $region12
      $region11: #{tpu_custom_call.1} parent=5 // pred_region
        %s167 = ssub.s32 %s17, 1
        // Predicated region
        $region13: #{tpu_custom_call.1} parent=11 // pred_check
          %p168 = pneg %p64
        $region14: #{tpu_custom_call.1} parent=11 // pred_check_branch
          %170 = sbr.rel (%p168) target = $region16
        $region15: #{tpu_custom_call.1} parent=11 // pred_region
          _
        $region16: #{tpu_custom_call.1} parent=11 // pred_fallthru
          _
        // Predicated region
        $region17: #{tpu_custom_call.1} parent=11 // pred_check
          %p171 = pneg %p85
        $region18: #{tpu_custom_call.1} parent=11 // pred_check_branch
          %173 = sbr.rel (%p171) target = $region20
        $region19: #{tpu_custom_call.1} parent=11 // pred_region
          _
        $region20: #{tpu_custom_call.1} parent=11 // pred_fallthru
          _
        // Predicated region
        $region21: #{tpu_custom_call.1} parent=11 // pred_check
          %p174 = pneg %p106
        $region22: #{tpu_custom_call.1} parent=11 // pred_check_branch
          %176 = sbr.rel (%p174) target = $region24
        $region23: #{tpu_custom_call.1} parent=11 // pred_region
          _
        $region24: #{tpu_custom_call.1} parent=11 // pred_fallthru
          _
        // Predicated region
        $region25: #{tpu_custom_call.1} parent=11 // pred_check
          %p177 = pneg %p127
        $region26: #{tpu_custom_call.1} parent=11 // pred_check_branch
          %179 = sbr.rel (%p177) target = $region28
        $region27: #{tpu_custom_call.1} parent=11 // pred_region
          _
        $region28: #{tpu_custom_call.1} parent=11 // pred_fallthru
          _
      $region12: #{tpu_custom_call.1} parent=5 // pred_fallthru
        _
      %p180 = scmp.lt.s32.totalorder %s17, 2
      // Predicated region
      $region29: #{tpu_custom_call.1} parent=5 // pred_check
        %p181 = pneg %p180
      $region30: #{tpu_custom_call.1} parent=5 // pred_check_branch
        %183 = sbr.rel (%p181) target = $region32
      $region31: #{tpu_custom_call.1} parent=5 // pred_region
        // Predicated region
        $region33: #{tpu_custom_call.1} parent=31 // pred_check
          %p184 = pneg %p37
        $region34: #{tpu_custom_call.1} parent=31 // pred_check_branch
          %186 = sbr.rel (%p184) target = $region36
        $region35: #{tpu_custom_call.1} parent=31 // pred_region
          %s187 = sand.u32 %s27, 1
          %s188 = scalar_lea.sflag [#allocation3], %s187
          %s189 = sand.u32 %s27, 1
          %s190 = smul.addr %s189, 32
          %s191 = scalar_lea.vmem [#allocation2], %s190
          %193 = vsyncadd %s188, 0
          %s194 = smul.addr %s17, 4
          %s195 = smul.addr %s194, 8
          %s196 = scalar_lea.hbm %s0, %s195
          %s197 = sshll.u32 %s196, 4
          %s198 = int_to_ptr.hbm [resolvable:$true] %s197
          %s199 = sshll.u32 %s191, 4
          %s200 = int_to_ptr.vmem [resolvable:$true] %s199
          %205 = dma.hbm_to_vmem [thread:$0]  %s198, 512, %s200, %s188, 256, 256, 16
        $region36: #{tpu_custom_call.1} parent=31 // pred_fallthru
          _
      $region32: #{tpu_custom_call.1} parent=5 // pred_fallthru
        _
      %p206 = scmp.le.s32.totalorder 1, %s17
      %p207 = scmp.lt.s32.totalorder %s17, 3
      %p208 = pnand %p206, %p207
      %p209 = pneg %p208
      // Predicated region
      $region37: #{tpu_custom_call.1} parent=5 // pred_check
        _
      $region38: #{tpu_custom_call.1} parent=5 // pred_check_branch
        %211 = sbr.rel (%p208) target = $region40
      $region39: #{tpu_custom_call.1} parent=5 // pred_region
        %s212 = ssub.s32 %s17, 1
        %s213 = sand.u32 %s30, 1
        %s214 = scalar_lea.sflag [#allocation3], %s213
        %s215 = sand.u32 %s30, 1
        %s216 = smul.addr %s215, 32
        %s217 = scalar_lea.vmem [#allocation2], %s216
        // Predicated region
        $region41: #{tpu_custom_call.1} parent=39 // pred_check
          %p218 = pneg %p43
        $region42: #{tpu_custom_call.1} parent=39 // pred_check_branch
          %220 = sbr.rel (%p218) target = $region44
        $region43: #{tpu_custom_call.1} parent=39 // pred_region
          %222 = dma.done %s214, 512
        $region44: #{tpu_custom_call.1} parent=39 // pred_fallthru
          _
        %s223 = sand.u32 %s30, 1
        %s224 = scalar_lea.sflag [#allocation3], %s223
        %s225 = sand.u32 %s30, 1
        %s226 = smul.addr %s225, 32
        %s227 = scalar_lea.vmem [#allocation2], %s226
        %p228 = pneg %p43
        %p229 = pneg %p40
        %p230 = pneg %p64
        %p231 = pneg %p61
        %p232 = pneg %p85
        %p233 = pneg %p82
        %p234 = pneg %p106
        %p235 = pneg %p103
        %p236 = pneg %p127
        %p237 = pneg %p124
        %p238 = pneg %p153
        %p239 = pneg %p150
        %s240 = sand.u32 %s140, 1
        %s241 = scalar_lea.sflag [#allocation4], %s240
        %s242 = sand.u32 %s140, 1
        %s243 = smul.addr %s242, 32
        %s244 = scalar_lea.vmem [#allocation5], %s243
        %v245 = vld [vmem:[%s217] sm:$0xff]
        %v246 = vld [vmem:[%s217 + $0x8] sm:$0xff]
        %v247 = vld [vmem:[%s217 + $0x10] sm:$0xff]
        %v248 = vld [vmem:[%s217 + $0x18] sm:$0xff]
        %vm249 = vcmask 556032
        %v250 = vsel %vm249, %v246, 0.0
        %v251 = vadd.f32 %v245, %v250
        %252 = vadd.xlane.f32.xlu0 %v251
        %v253 = vpop.xlane.xlu0 %252
        %v254 = vsel %vm249, %v248, 0.0
        %v255 = vadd.f32 %v247, %v254
        %256 = vadd.xlane.f32.xlu0 %v255
        %v257 = vpop.xlane.xlu0 %256
        %v258 = vmul.f32 %v253, 0.0051020407
        %v259 = vmul.f32 %v257, 0.0051020407
        %v260 = vld [vmem:[%s1] sm:$0xff]
        %v261 = vld [vmem:[%s1 + $0x8] sm:$0xff]
        %v262 = vld [vmem:[%s2] sm:$0x1]
        %v265 = vlaneseq
        %v266 = vand.u32 %v265, 127
        %v267 = vperm.slane %v258, %v266
        %v268 = vadd.s32 %v266, 4294967288
        %v269 = vperm.slane %v259, %v268
        %vm270 = vcmask 130112
        %v271 = vsel %vm270, %v269, %v267
        %vm272 = vcmask 130048
        %v273 = vsel %vm272, %v271, 0
        %275 = vmatpush.msra.mxu0 0.0
        %276 = vmatpush.msra.mxu0 0.0
        %277 = vmatpush.msra.mxu0 0.0
        %278 = vmatpush.msra.mxu0 0.0
        %279 = vmatpush.msra.mxu0 0.0
        %280 = vmatpush.msra.mxu0 0.0
        %281 = vmatpush.msra.mxu0 0.0
        %282 = vmatpush.msra.mxu0 0.0
        %283 = vmatpush.msra.mxu0 0.0
        %284 = vmatpush.msra.mxu0 0.0
        %285 = vmatpush.msra.mxu0 0.0
        %286 = vmatpush.msra.mxu0 0.0
        %287 = vmatpush.msra.mxu0 0.0
        %288 = vmatpush.msra.mxu0 0.0
        %289 = vmatpush.msra.mxu0 %v261
        %290 = vmatpush.msra.mxu0 %v260
        %291 = vmatmul.f32.gmra.mxu0 %v273
        %v292 = vpop.f32.mrf.mxu0
        %v293 = vadd.f32 %v262, %v292
        %294 = vdwg.mxu0
        %v295 = vmax.f32 %v293, 0.0
        %v296 = vld [vmem:[%s3] sm:$0xff]
        %v297 = vld [vmem:[%s4] sm:$0x1]
        %vm298 = vcmask 64512
        %v300 = vsel %vm298, %v295, 0
        %302 = vmatpush.msra.mxu0 0.0
        %303 = vmatpush.msra.mxu0 0.0
        %304 = vmatpush.msra.mxu0 0.0
        %305 = vmatpush.msra.mxu0 0.0
        %306 = vmatpush.msra.mxu0 0.0
        %307 = vmatpush.msra.mxu0 0.0
        %308 = vmatpush.msra.mxu0 0.0
        %309 = vmatpush.msra.mxu0 0.0
        %310 = vmatpush.msra.mxu0 0.0
        %311 = vmatpush.msra.mxu0 0.0
        %312 = vmatpush.msra.mxu0 0.0
        %313 = vmatpush.msra.mxu0 0.0
        %314 = vmatpush.msra.mxu0 0.0
        %315 = vmatpush.msra.mxu0 0.0
        %316 = vmatpush.msra.mxu0 0.0
        %317 = vmatpush.msra.mxu0 %v296
        %318 = vmatmul.f32.gmra.mxu0 %v300
        %v319 = vpop.f32.mrf.mxu0
        %v320 = vadd.f32 %v297, %v319
        %321 = vdwg.mxu0
        %v322 = vadd.f32 %v320, 3.0
        %v323 = vmax.f32 %v322, 0.0
        %v324 = vmin.f32 %v323, 6.0
        %v325 = vmul.f32 %v324, 0.16666667
        %v326 = vperm.slane %v325, 0
        %v327 = vlaneseq
        %v328 = vshrl.u32 %v327, 7
        %330 = vset.pattern.permute.xlu0 %v328
        %331 = vperm.xlu0 %330, %v326
        %v332 = vpop.permute.xlu0 %331
        %v333 = vlaneseq
        %v334 = vshrl.u32 %v333, 7
        %v335 = vadd.s32 %v334, 8
        %336 = vset.pattern.permute.xlu0 %v335
        %337 = vperm.xlu0 %336, %v326
        %v338 = vpop.permute.xlu0 %337
        %v339 = vmul.f32 %v332, %v245
        %v340 = vmul.f32 %v332, %v246
        %v341 = vmul.f32 %v338, %v247
        %v342 = vmul.f32 %v338, %v248
        %343 = vst [vmem:[%s244] sm:$0xff] %v339
        %344 = vst.msk [vmem:[%s244 + $0x8] sm:$0xff] %vm249, %v340
        %345 = vst [vmem:[%s244 + $0x10] sm:$0xff] %v341
        %346 = vst.msk [vmem:[%s244 + $0x18] sm:$0xff] %vm249, %v342
        %s347 = sand.u32 %s140, 1
        %s348 = scalar_lea.sflag [#allocation4], %s347
        %s349 = sand.u32 %s140, 1
        %s350 = smul.addr %s349, 32
        %s351 = scalar_lea.vmem [#allocation5], %s350
        // Predicated region
        $region45: #{tpu_custom_call.1} parent=39 // pred_check
          %p352 = pneg %p150
        $region46: #{tpu_custom_call.1} parent=39 // pred_check_branch
          %354 = sbr.rel (%p352) target = $region48
        $region47: #{tpu_custom_call.1} parent=39 // pred_region
          %356 = vsyncadd %s348, 0
          %s357 = smul.addr %s22, 4
          %s358 = smul.addr %s357, 8
          %s359 = scalar_lea.hbm %s5, %s358
          %s360 = sshll.u32 %s351, 4
          %s361 = int_to_ptr.vmem [resolvable:$true] %s360
          %s362 = sshll.u32 %s359, 4
          %s363 = int_to_ptr.hbm [resolvable:$true] %s362
          %368 = dma.vmem_to_hbm [thread:$0]  %s361, 512, %s363, %s348, 256, 256, 16
        $region48: #{tpu_custom_call.1} parent=39 // pred_fallthru
          _
      $region40: #{tpu_custom_call.1} parent=5 // pred_fallthru
        _
      %p369 = scmp.le.s32.totalorder 2, %s17
      // Predicated region
      $region49: #{tpu_custom_call.1} parent=5 // pred_check
        %p370 = pneg %p369
      $region50: #{tpu_custom_call.1} parent=5 // pred_check_branch
        %372 = sbr.rel (%p370) target = $region52
      $region51: #{tpu_custom_call.1} parent=5 // pred_region
        %s373 = ssub.s32 %s17, 2
        // Predicated region
        $region53: #{tpu_custom_call.1} parent=51 // pred_check
          %p374 = pneg %p156
        $region54: #{tpu_custom_call.1} parent=51 // pred_check_branch
          %376 = sbr.rel (%p374) target = $region56
        $region55: #{tpu_custom_call.1} parent=51 // pred_region
          %s377 = sand.u32 %s141, 1
          %s378 = scalar_lea.sflag [#allocation4], %s377
          %s379 = sand.u32 %s141, 1
          %s380 = smul.addr %s379, 32
          %s381 = scalar_lea.vmem [#allocation5], %s380
          %383 = dma.done %s378, 512
        $region56: #{tpu_custom_call.1} parent=51 // pred_fallthru
          _
      $region52: #{tpu_custom_call.1} parent=5 // pred_fallthru
        _
    $region6: #{tpu_custom_call.1} parent=1 // loop_footer
      %s21 = sadd.s32 1, %s17
    $region7: #{tpu_custom_call.1} parent=1 // loop_footer_branch
      %16 = sbr.rel target = $region3
    $region8: #{tpu_custom_call.1} parent=1 // loop_exit
      _
    %384 = vsyncpa [#allocation3], 1
    %s385 = scalar_lea.sflag [#allocation3], 1
    %386 = vsyncpa %s385, 1
    %387 = vsyncpa [#allocation4], 1
    %s388 = scalar_lea.sflag [#allocation4], 1
    %389 = vsyncpa %s388, 1

</llo_original>
